<compile_context>
chip_gen: v7x
topology: tpu7x:2x2x1
jax: 0.10.0
libtpu: 0.0.40
codegen_flags: <defaults>
</compile_context>

<pallas_src>
import jax
import jax.numpy as jnp
from jax import lax
from jax.experimental import pallas as pl
from jax.experimental.pallas import tpu as pltpu

# ---- config (small synthetic sizes consistent with the module) ----
NUM_ENCODER_TOKENS = 16   # config.num_encoder_tokens (input_size)
LATENT_DIM = 32           # config.latent_dim         (hidden_size)
BATCH = 2
SEQ = 8


def lstm_kernel(x2d_ref, w_ih_ref, w_hh_ref, b_ref, hc_out_ref):
    """Whole LSTM recurrence in one kernel invocation.

    x2d_ref:  (T*B, I)  time-major flattened input (step-t rows contiguous)
    w_ih_ref: (I, 4H)   input->gates weight, pre-transposed (PyTorch i,f,g,o)
    w_hh_ref: (H, 4H)   hidden->gates weight, pre-transposed
    b_ref:    (1, 4H)   fused bias (b_ih + b_hh)
    hc_out_ref: (2, B, H)  packed final states; [0]=h_T, [1]=c_T
    """
    TB, _ = x2d_ref.shape
    H = w_hh_ref.shape[0]
    B = hc_out_ref.shape[1]
    T = TB // B

    # Hoist all loads out of the loop: each operand is read exactly once.
    w_hh = w_hh_ref[...]                               # (H, 4H)

    # Fused input projection for ALL time steps: one MXU matmul, one bias add.
    # Independent of (h, c) => sits entirely off the serial critical path.
    pre_all = jnp.dot(x2d_ref[...], w_ih_ref[...],
                      preferred_element_type=jnp.float32) + b_ref[...]  # (T*B, 4H)

    h = jnp.zeros((B, H), jnp.float32)
    c = jnp.zeros((B, H), jnp.float32)

    half = jnp.float32(0.5)

    # Fully-unrolled serial recurrence: one (B,H)x(H,4H) MXU op + 3 EUP passes
    # per step (tanh on full gate tile, tanh for sigmoid on full gate tile,
    # tanh(c)); all slice indices are static.
    for t in range(T):
        gates = pre_all[t * B:(t + 1) * B, :] + jnp.dot(
            h, w_hh, preferred_element_type=jnp.float32)      # (B, 4H)

        # sigmoid(x) = 0.5*tanh(0.5*x) + 0.5  -> exactly 1 EUP op on the full tile
        sig_full = half * jnp.tanh(half * gates) + half        # (B, 4H)
        tanh_full = jnp.tanh(gates)                            # (B, 4H)

        i_g = sig_full[:, 0 * H:1 * H]
        f_g = sig_full[:, 1 * H:2 * H]
        g_g = tanh_full[:, 2 * H:3 * H]
        o_g = sig_full[:, 3 * H:4 * H]

        c = f_g * c + i_g * g_g
        h = o_g * jnp.tanh(c)

    hc_out_ref[0, :, :] = h
    hc_out_ref[1, :, :] = c


def prepare_params(w_ih, w_hh, b_ih, b_hh):
    """One-time parameter preprocessing (do this at load time, not per call)."""
    w_ih_t = jnp.transpose(w_ih)                     # (I, 4H)
    w_hh_t = jnp.transpose(w_hh)                     # (H, 4H)
    bias = (b_ih + b_hh).reshape(1, -1)              # (1, 4H)
    return w_ih_t, w_hh_t, bias


def encoder_lstm_forward(encoder_inputs, w_ih_t, w_hh_t, bias):
    """encoder_inputs: (B, T, I) float32 (batch_first, like the PyTorch module).

    Returns (state_h, state_c), each (1, B, H), matching nn.LSTM's final states.
    """
    B, T, I = encoder_inputs.shape
    H = w_hh_t.shape[0]

    # (B,T,I) -> (T*B, I) so that the rows of time step t are contiguous; this
    # lets the kernel do a single fused input-projection matmul.
    x2d = jnp.transpose(encoder_inputs, (1, 0, 2)).reshape(T * B, I)

    vmem_spec = pl.BlockSpec(memory_space=pltpu.MemorySpace.VMEM)

    # NOTE(v7x): at production batch sizes add a "parallel" grid axis over
    # batch tiles to use both TensorCores; at B=2 one invocation is optimal.
    hc = pl.pallas_call(
        lstm_kernel,
        out_shape=jax.ShapeDtypeStruct((2, B, H), jnp.float32),
        in_specs=[vmem_spec, vmem_spec, vmem_spec, vmem_spec],
        out_specs=vmem_spec,
    )(x2d, w_ih_t, w_hh_t, bias)

    # Match PyTorch: (num_layers * num_directions, batch, hidden) = (1, B, H)
    return hc[0:1], hc[1:2]


def _reference_lstm(x, w_ih, w_hh, b_ih, b_hh):
    """Pure-JAX reference (PyTorch LSTM semantics, gate order i,f,g,o)."""
    B, T, I = x.shape
    H = w_hh.shape[1]

    def step(carry, x_t):
        h, c = carry
        gates = x_t @ w_ih.T + h @ w_hh.T + b_ih + b_hh
        i_g = jax.nn.sigmoid(gates[:, 0 * H:1 * H])
        f_g = jax.nn.sigmoid(gates[:, 1 * H:2 * H])
        g_g = jnp.tanh(gates[:, 2 * H:3 * H])
        o_g = jax.nn.sigmoid(gates[:, 3 * H:4 * H])
        c_new = f_g * c + i_g * g_g
        h_new = o_g * jnp.tanh(c_new)
        return (h_new, c_new), None

    h0 = jnp.zeros((B, H), jnp.float32)
    c0 = jnp.zeros((B, H), jnp.float32)
    (h, c), _ = lax.scan(step, (h0, c0), jnp.transpose(x, (1, 0, 2)))
    return h[None], c[None]


if __name__ == "__main__":
    key = jax.random.PRNGKey(0)
    k_x, k_wih, k_whh, k_bih, k_bhh = jax.random.split(key, 5)

    I, H = NUM_ENCODER_TOKENS, LATENT_DIM
    bound = 1.0 / jnp.sqrt(jnp.float32(H))   # PyTorch LSTM default init range

    encoder_inputs = jax.random.normal(k_x, (BATCH, SEQ, I), dtype=jnp.float32)
    w_ih = jax.random.uniform(k_wih, (4 * H, I), minval=-bound, maxval=bound,
                              dtype=jnp.float32)
    w_hh = jax.random.uniform(k_whh, (4 * H, H), minval=-bound, maxval=bound,
                              dtype=jnp.float32)
    b_ih = jax.random.uniform(k_bih, (4 * H,), minval=-bound, maxval=bound,
                              dtype=jnp.float32)
    b_hh = jax.random.uniform(k_bhh, (4 * H,), minval=-bound, maxval=bound,
                              dtype=jnp.float32)

    # One-time parameter preprocessing (hoisted out of the per-call path).
    w_ih_t, w_hh_t, bias = prepare_params(w_ih, w_hh, b_ih, b_hh)
    jax.block_until_ready((w_ih_t, w_hh_t, bias))

    state_h, state_c = encoder_lstm_forward(encoder_inputs, w_ih_t, w_hh_t, bias)
    jax.block_until_ready((state_h, state_c))

    # Sanity check against pure-JAX reference.
    ref_h, ref_c = _reference_lstm(encoder_inputs, w_ih, w_hh, b_ih, b_hh)
    assert state_h.shape == (1, BATCH, H) and state_c.shape == (1, BATCH, H)
    assert jnp.allclose(state_h, ref_h, atol=1e-5, rtol=1e-5)
    assert jnp.allclose(state_c, ref_c, atol=1e-5, rtol=1e-5)

    print("KERNEL_OK")
</pallas_src>

<mosaic_0001>
module attributes {stable_mosaic.version = 11 : i64} {
  func.func @lstm_kernel(%arg0: memref<16x16xf32, #tpu.memory_space<vmem>>, %arg1: memref<16x128xf32, #tpu.memory_space<vmem>>, %arg2: memref<32x128xf32, #tpu.memory_space<vmem>>, %arg3: memref<1x128xf32, #tpu.memory_space<vmem>>, %arg4: memref<2x2x32xf32, #tpu.memory_space<vmem>>) attributes {dimension_semantics = [], scalar_prefetch = 0 : i64, scratch_operands = 0 : i64, tpu.core_type = #tpu.core_type<tc>} {
    %c0 = arith.constant 0 : index
    %c0_0 = arith.constant 0 : index
    %0 = vector.load %arg2[%c0, %c0_0] : memref<32x128xf32, #tpu.memory_space<vmem>>, vector<32x128xf32>
    %c0_1 = arith.constant 0 : index
    %c0_2 = arith.constant 0 : index
    %1 = vector.load %arg0[%c0_1, %c0_2] : memref<16x16xf32, #tpu.memory_space<vmem>>, vector<16x16xf32>
    %c0_3 = arith.constant 0 : index
    %c0_4 = arith.constant 0 : index
    %2 = vector.load %arg1[%c0_3, %c0_4] : memref<16x128xf32, #tpu.memory_space<vmem>>, vector<16x128xf32>
    %cst = arith.constant dense<0.000000e+00> : vector<16x128xf32>
    %3 = tpu.matmul %1, %2, %cst {dimension_numbers = #tpu.dot_dimension_numbers<[1], [0], [0], [1], [0, 0, 1, 1], [], []>} : vector<16x16xf32>, vector<16x128xf32>, vector<16x128xf32> -> vector<16x128xf32>
    %c0_5 = arith.constant 0 : index
    %c0_6 = arith.constant 0 : index
    %4 = vector.load %arg3[%c0_5, %c0_6] : memref<1x128xf32, #tpu.memory_space<vmem>>, vector<1x128xf32>
    %5 = vector.broadcast %4 : vector<1x128xf32> to vector<16x128xf32>
    %6 = arith.addf %3, %5 : vector<16x128xf32>
    %cst_7 = arith.constant 0.000000e+00 : f32
    %7 = vector.broadcast %cst_7 : f32 to vector<2x32xf32>
    %cst_8 = arith.constant 0.000000e+00 : f32
    %8 = vector.broadcast %cst_8 : f32 to vector<2x32xf32>
    %9 = vector.extract_strided_slice %6 {offsets = [0, 0], sizes = [2, 128], strides = [1, 1]} : vector<16x128xf32> to vector<2x128xf32>
    %cst_9 = arith.constant dense<0.000000e+00> : vector<2x128xf32>
    %10 = tpu.matmul %7, %0, %cst_9 {dimension_numbers = #tpu.dot_dimension_numbers<[1], [0], [0], [1], [0, 0, 1, 1], [], []>} : vector<2x32xf32>, vector<32x128xf32>, vector<2x128xf32> -> vector<2x128xf32>
    %11 = arith.addf %9, %10 : vector<2x128xf32>
    %cst_10 = arith.constant 5.000000e-01 : f32
    %12 = vector.broadcast %cst_10 : f32 to vector<2x128xf32>
    %13 = arith.mulf %12, %11 : vector<2x128xf32>
    %14 = math.tanh %13 : vector<2x128xf32>
    %cst_11 = arith.constant 5.000000e-01 : f32
    %15 = vector.broadcast %cst_11 : f32 to vector<2x128xf32>
    %16 = arith.mulf %15, %14 : vector<2x128xf32>
    %cst_12 = arith.constant 5.000000e-01 : f32
    %17 = vector.broadcast %cst_12 : f32 to vector<2x128xf32>
    %18 = arith.addf %16, %17 : vector<2x128xf32>
    %19 = math.tanh %11 : vector<2x128xf32>
    %20 = vector.extract_strided_slice %18 {offsets = [0, 0], sizes = [2, 32], strides = [1, 1]} : vector<2x128xf32> to vector<2x32xf32>
    %21 = vector.extract_strided_slice %18 {offsets = [0, 32], sizes = [2, 32], strides = [1, 1]} : vector<2x128xf32> to vector<2x32xf32>
    %22 = vector.extract_strided_slice %19 {offsets = [0, 64], sizes = [2, 32], strides = [1, 1]} : vector<2x128xf32> to vector<2x32xf32>
    %23 = vector.extract_strided_slice %18 {offsets = [0, 96], sizes = [2, 32], strides = [1, 1]} : vector<2x128xf32> to vector<2x32xf32>
    %24 = arith.mulf %21, %8 : vector<2x32xf32>
    %25 = arith.mulf %20, %22 : vector<2x32xf32>
    %26 = arith.addf %24, %25 : vector<2x32xf32>
    %27 = math.tanh %26 : vector<2x32xf32>
    %28 = arith.mulf %23, %27 : vector<2x32xf32>
    %29 = vector.extract_strided_slice %6 {offsets = [2, 0], sizes = [2, 128], strides = [1, 1]} : vector<16x128xf32> to vector<2x128xf32>
    %cst_13 = arith.constant dense<0.000000e+00> : vector<2x128xf32>
    %30 = tpu.matmul %28, %0, %cst_13 {dimension_numbers = #tpu.dot_dimension_numbers<[1], [0], [0], [1], [0, 0, 1, 1], [], []>} : vector<2x32xf32>, vector<32x128xf32>, vector<2x128xf32> -> vector<2x128xf32>
    %31 = arith.addf %29, %30 : vector<2x128xf32>
    %cst_14 = arith.constant 5.000000e-01 : f32
    %32 = vector.broadcast %cst_14 : f32 to vector<2x128xf32>
    %33 = arith.mulf %32, %31 : vector<2x128xf32>
    %34 = math.tanh %33 : vector<2x128xf32>
    %cst_15 = arith.constant 5.000000e-01 : f32
    %35 = vector.broadcast %cst_15 : f32 to vector<2x128xf32>
    %36 = arith.mulf %35, %34 : vector<2x128xf32>
    %cst_16 = arith.constant 5.000000e-01 : f32
    %37 = vector.broadcast %cst_16 : f32 to vector<2x128xf32>
    %38 = arith.addf %36, %37 : vector<2x128xf32>
    %39 = math.tanh %31 : vector<2x128xf32>
    %40 = vector.extract_strided_slice %38 {offsets = [0, 0], sizes = [2, 32], strides = [1, 1]} : vector<2x128xf32> to vector<2x32xf32>
    %41 = vector.extract_strided_slice %38 {offsets = [0, 32], sizes = [2, 32], strides = [1, 1]} : vector<2x128xf32> to vector<2x32xf32>
    %42 = vector.extract_strided_slice %39 {offsets = [0, 64], sizes = [2, 32], strides = [1, 1]} : vector<2x128xf32> to vector<2x32xf32>
    %43 = vector.extract_strided_slice %38 {offsets = [0, 96], sizes = [2, 32], strides = [1, 1]} : vector<2x128xf32> to vector<2x32xf32>
    %44 = arith.mulf %41, %26 : vector<2x32xf32>
    %45 = arith.mulf %40, %42 : vector<2x32xf32>
    %46 = arith.addf %44, %45 : vector<2x32xf32>
    %47 = math.tanh %46 : vector<2x32xf32>
    %48 = arith.mulf %43, %47 : vector<2x32xf32>
    %49 = vector.extract_strided_slice %6 {offsets = [4, 0], sizes = [2, 128], strides = [1, 1]} : vector<16x128xf32> to vector<2x128xf32>
    %cst_17 = arith.constant dense<0.000000e+00> : vector<2x128xf32>
    %50 = tpu.matmul %48, %0, %cst_17 {dimension_numbers = #tpu.dot_dimension_numbers<[1], [0], [0], [1], [0, 0, 1, 1], [], []>} : vector<2x32xf32>, vector<32x128xf32>, vector<2x128xf32> -> vector<2x128xf32>
    %51 = arith.addf %49, %50 : vector<2x128xf32>
    %cst_18 = arith.constant 5.000000e-01 : f32
    %52 = vector.broadcast %cst_18 : f32 to vector<2x128xf32>
    %53 = arith.mulf %52, %51 : vector<2x128xf32>
    %54 = math.tanh %53 : vector<2x128xf32>
    %cst_19 = arith.constant 5.000000e-01 : f32
    %55 = vector.broadcast %cst_19 : f32 to vector<2x128xf32>
    %56 = arith.mulf %55, %54 : vector<2x128xf32>
    %cst_20 = arith.constant 5.000000e-01 : f32
    %57 = vector.broadcast %cst_20 : f32 to vector<2x128xf32>
    %58 = arith.addf %56, %57 : vector<2x128xf32>
    %59 = math.tanh %51 : vector<2x128xf32>
    %60 = vector.extract_strided_slice %58 {offsets = [0, 0], sizes = [2, 32], strides = [1, 1]} : vector<2x128xf32> to vector<2x32xf32>
    %61 = vector.extract_strided_slice %58 {offsets = [0, 32], sizes = [2, 32], strides = [1, 1]} : vector<2x128xf32> to vector<2x32xf32>
    %62 = vector.extract_strided_slice %59 {offsets = [0, 64], sizes = [2, 32], strides = [1, 1]} : vector<2x128xf32> to vector<2x32xf32>
    %63 = vector.extract_strided_slice %58 {offsets = [0, 96], sizes = [2, 32], strides = [1, 1]} : vector<2x128xf32> to vector<2x32xf32>
    %64 = arith.mulf %61, %46 : vector<2x32xf32>
    %65 = arith.mulf %60, %62 : vector<2x32xf32>
    %66 = arith.addf %64, %65 : vector<2x32xf32>
    %67 = math.tanh %66 : vector<2x32xf32>
    %68 = arith.mulf %63, %67 : vector<2x32xf32>
    %69 = vector.extract_strided_slice %6 {offsets = [6, 0], sizes = [2, 128], strides = [1, 1]} : vector<16x128xf32> to vector<2x128xf32>
    %cst_21 = arith.constant dense<0.000000e+00> : vector<2x128xf32>
    %70 = tpu.matmul %68, %0, %cst_21 {dimension_numbers = #tpu.dot_dimension_numbers<[1], [0], [0], [1], [0, 0, 1, 1], [], []>} : vector<2x32xf32>, vector<32x128xf32>, vector<2x128xf32> -> vector<2x128xf32>
    %71 = arith.addf %69, %70 : vector<2x128xf32>
    %cst_22 = arith.constant 5.000000e-01 : f32
    %72 = vector.broadcast %cst_22 : f32 to vector<2x128xf32>
    %73 = arith.mulf %72, %71 : vector<2x128xf32>
    %74 = math.tanh %73 : vector<2x128xf32>
    %cst_23 = arith.constant 5.000000e-01 : f32
    %75 = vector.broadcast %cst_23 : f32 to vector<2x128xf32>
    %76 = arith.mulf %75, %74 : vector<2x128xf32>
    %cst_24 = arith.constant 5.000000e-01 : f32
    %77 = vector.broadcast %cst_24 : f32 to vector<2x128xf32>
    %78 = arith.addf %76, %77 : vector<2x128xf32>
    %79 = math.tanh %71 : vector<2x128xf32>
    %80 = vector.extract_strided_slice %78 {offsets = [0, 0], sizes = [2, 32], strides = [1, 1]} : vector<2x128xf32> to vector<2x32xf32>
    %81 = vector.extract_strided_slice %78 {offsets = [0, 32], sizes = [2, 32], strides = [1, 1]} : vector<2x128xf32> to vector<2x32xf32>
    %82 = vector.extract_strided_slice %79 {offsets = [0, 64], sizes = [2, 32], strides = [1, 1]} : vector<2x128xf32> to vector<2x32xf32>
    %83 = vector.extract_strided_slice %78 {offsets = [0, 96], sizes = [2, 32], strides = [1, 1]} : vector<2x128xf32> to vector<2x32xf32>
    %84 = arith.mulf %81, %66 : vector<2x32xf32>
    %85 = arith.mulf %80, %82 : vector<2x32xf32>
    %86 = arith.addf %84, %85 : vector<2x32xf32>
    %87 = math.tanh %86 : vector<2x32xf32>
    %88 = arith.mulf %83, %87 : vector<2x32xf32>
    %89 = vector.extract_strided_slice %6 {offsets = [8, 0], sizes = [2, 128], strides = [1, 1]} : vector<16x128xf32> to vector<2x128xf32>
    %cst_25 = arith.constant dense<0.000000e+00> : vector<2x128xf32>
    %90 = tpu.matmul %88, %0, %cst_25 {dimension_numbers = #tpu.dot_dimension_numbers<[1], [0], [0], [1], [0, 0, 1, 1], [], []>} : vector<2x32xf32>, vector<32x128xf32>, vector<2x128xf32> -> vector<2x128xf32>
    %91 = arith.addf %89, %90 : vector<2x128xf32>
    %cst_26 = arith.constant 5.000000e-01 : f32
    %92 = vector.broadcast %cst_26 : f32 to vector<2x128xf32>
    %93 = arith.mulf %92, %91 : vector<2x128xf32>
    %94 = math.tanh %93 : vector<2x128xf32>
    %cst_27 = arith.constant 5.000000e-01 : f32
    %95 = vector.broadcast %cst_27 : f32 to vector<2x128xf32>
    %96 = arith.mulf %95, %94 : vector<2x128xf32>
    %cst_28 = arith.constant 5.000000e-01 : f32
    %97 = vector.broadcast %cst_28 : f32 to vector<2x128xf32>
    %98 = arith.addf %96, %97 : vector<2x128xf32>
    %99 = math.tanh %91 : vector<2x128xf32>
    %100 = vector.extract_strided_slice %98 {offsets = [0, 0], sizes = [2, 32], strides = [1, 1]} : vector<2x128xf32> to vector<2x32xf32>
    %101 = vector.extract_strided_slice %98 {offsets = [0, 32], sizes = [2, 32], strides = [1, 1]} : vector<2x128xf32> to vector<2x32xf32>
    %102 = vector.extract_strided_slice %99 {offsets = [0, 64], sizes = [2, 32], strides = [1, 1]} : vector<2x128xf32> to vector<2x32xf32>
    %103 = vector.extract_strided_slice %98 {offsets = [0, 96], sizes = [2, 32], strides = [1, 1]} : vector<2x128xf32> to vector<2x32xf32>
    %104 = arith.mulf %101, %86 : vector<2x32xf32>
    %105 = arith.mulf %100, %102 : vector<2x32xf32>
    %106 = arith.addf %104, %105 : vector<2x32xf32>
    %107 = math.tanh %106 : vector<2x32xf32>
    %108 = arith.mulf %103, %107 : vector<2x32xf32>
    %109 = vector.extract_strided_slice %6 {offsets = [10, 0], sizes = [2, 128], strides = [1, 1]} : vector<16x128xf32> to vector<2x128xf32>
    %cst_29 = arith.constant dense<0.000000e+00> : vector<2x128xf32>
    %110 = tpu.matmul %108, %0, %cst_29 {dimension_numbers = #tpu.dot_dimension_numbers<[1], [0], [0], [1], [0, 0, 1, 1], [], []>} : vector<2x32xf32>, vector<32x128xf32>, vector<2x128xf32> -> vector<2x128xf32>
    %111 = arith.addf %109, %110 : vector<2x128xf32>
    %cst_30 = arith.constant 5.000000e-01 : f32
    %112 = vector.broadcast %cst_30 : f32 to vector<2x128xf32>
    %113 = arith.mulf %112, %111 : vector<2x128xf32>
    %114 = math.tanh %113 : vector<2x128xf32>
    %cst_31 = arith.constant 5.000000e-01 : f32
    %115 = vector.broadcast %cst_31 : f32 to vector<2x128xf32>
    %116 = arith.mulf %115, %114 : vector<2x128xf32>
    %cst_32 = arith.constant 5.000000e-01 : f32
    %117 = vector.broadcast %cst_32 : f32 to vector<2x128xf32>
    %118 = arith.addf %116, %117 : vector<2x128xf32>
    %119 = math.tanh %111 : vector<2x128xf32>
    %120 = vector.extract_strided_slice %118 {offsets = [0, 0], sizes = [2, 32], strides = [1, 1]} : vector<2x128xf32> to vector<2x32xf32>
    %121 = vector.extract_strided_slice %118 {offsets = [0, 32], sizes = [2, 32], strides = [1, 1]} : vector<2x128xf32> to vector<2x32xf32>
    %122 = vector.extract_strided_slice %119 {offsets = [0, 64], sizes = [2, 32], strides = [1, 1]} : vector<2x128xf32> to vector<2x32xf32>
    %123 = vector.extract_strided_slice %118 {offsets = [0, 96], sizes = [2, 32], strides = [1, 1]} : vector<2x128xf32> to vector<2x32xf32>
    %124 = arith.mulf %121, %106 : vector<2x32xf32>
    %125 = arith.mulf %120, %122 : vector<2x32xf32>
    %126 = arith.addf %124, %125 : vector<2x32xf32>
    %127 = math.tanh %126 : vector<2x32xf32>
    %128 = arith.mulf %123, %127 : vector<2x32xf32>
    %129 = vector.extract_strided_slice %6 {offsets = [12, 0], sizes = [2, 128], strides = [1, 1]} : vector<16x128xf32> to vector<2x128xf32>
    %cst_33 = arith.constant dense<0.000000e+00> : vector<2x128xf32>
    %130 = tpu.matmul %128, %0, %cst_33 {dimension_numbers = #tpu.dot_dimension_numbers<[1], [0], [0], [1], [0, 0, 1, 1], [], []>} : vector<2x32xf32>, vector<32x128xf32>, vector<2x128xf32> -> vector<2x128xf32>
    %131 = arith.addf %129, %130 : vector<2x128xf32>
    %cst_34 = arith.constant 5.000000e-01 : f32
    %132 = vector.broadcast %cst_34 : f32 to vector<2x128xf32>
    %133 = arith.mulf %132, %131 : vector<2x128xf32>
    %134 = math.tanh %133 : vector<2x128xf32>
    %cst_35 = arith.constant 5.000000e-01 : f32
    %135 = vector.broadcast %cst_35 : f32 to vector<2x128xf32>
    %136 = arith.mulf %135, %134 : vector<2x128xf32>
    %cst_36 = arith.constant 5.000000e-01 : f32
    %137 = vector.broadcast %cst_36 : f32 to vector<2x128xf32>
    %138 = arith.addf %136, %137 : vector<2x128xf32>
    %139 = math.tanh %131 : vector<2x128xf32>
    %140 = vector.extract_strided_slice %138 {offsets = [0, 0], sizes = [2, 32], strides = [1, 1]} : vector<2x128xf32> to vector<2x32xf32>
    %141 = vector.extract_strided_slice %138 {offsets = [0, 32], sizes = [2, 32], strides = [1, 1]} : vector<2x128xf32> to vector<2x32xf32>
    %142 = vector.extract_strided_slice %139 {offsets = [0, 64], sizes = [2, 32], strides = [1, 1]} : vector<2x128xf32> to vector<2x32xf32>
    %143 = vector.extract_strided_slice %138 {offsets = [0, 96], sizes = [2, 32], strides = [1, 1]} : vector<2x128xf32> to vector<2x32xf32>
    %144 = arith.mulf %141, %126 : vector<2x32xf32>
    %145 = arith.mulf %140, %142 : vector<2x32xf32>
    %146 = arith.addf %144, %145 : vector<2x32xf32>
    %147 = math.tanh %146 : vector<2x32xf32>
    %148 = arith.mulf %143, %147 : vector<2x32xf32>
    %149 = vector.extract_strided_slice %6 {offsets = [14, 0], sizes = [2, 128], strides = [1, 1]} : vector<16x128xf32> to vector<2x128xf32>
    %cst_37 = arith.constant dense<0.000000e+00> : vector<2x128xf32>
    %150 = tpu.matmul %148, %0, %cst_37 {dimension_numbers = #tpu.dot_dimension_numbers<[1], [0], [0], [1], [0, 0, 1, 1], [], []>} : vector<2x32xf32>, vector<32x128xf32>, vector<2x128xf32> -> vector<2x128xf32>
    %151 = arith.addf %149, %150 : vector<2x128xf32>
    %cst_38 = arith.constant 5.000000e-01 : f32
    %152 = vector.broadcast %cst_38 : f32 to vector<2x128xf32>
    %153 = arith.mulf %152, %151 : vector<2x128xf32>
    %154 = math.tanh %153 : vector<2x128xf32>
    %cst_39 = arith.constant 5.000000e-01 : f32
    %155 = vector.broadcast %cst_39 : f32 to vector<2x128xf32>
    %156 = arith.mulf %155, %154 : vector<2x128xf32>
    %cst_40 = arith.constant 5.000000e-01 : f32
    %157 = vector.broadcast %cst_40 : f32 to vector<2x128xf32>
    %158 = arith.addf %156, %157 : vector<2x128xf32>
    %159 = math.tanh %151 : vector<2x128xf32>
    %160 = vector.extract_strided_slice %158 {offsets = [0, 0], sizes = [2, 32], strides = [1, 1]} : vector<2x128xf32> to vector<2x32xf32>
    %161 = vector.extract_strided_slice %158 {offsets = [0, 32], sizes = [2, 32], strides = [1, 1]} : vector<2x128xf32> to vector<2x32xf32>
    %162 = vector.extract_strided_slice %159 {offsets = [0, 64], sizes = [2, 32], strides = [1, 1]} : vector<2x128xf32> to vector<2x32xf32>
    %163 = vector.extract_strided_slice %158 {offsets = [0, 96], sizes = [2, 32], strides = [1, 1]} : vector<2x128xf32> to vector<2x32xf32>
    %164 = arith.mulf %161, %146 : vector<2x32xf32>
    %165 = arith.mulf %160, %162 : vector<2x32xf32>
    %166 = arith.addf %164, %165 : vector<2x32xf32>
    %167 = math.tanh %166 : vector<2x32xf32>
    %168 = arith.mulf %163, %167 : vector<2x32xf32>
    %c0_41 = arith.constant 0 : index
    %c0_42 = arith.constant 0 : index
    %c0_43 = arith.constant 0 : index
    %169 = vector.load %arg4[%c0_41, %c0_42, %c0_43] : memref<2x2x32xf32, #tpu.memory_space<vmem>>, vector<1x2x32xf32>
    %170 = vector.shape_cast %169 : vector<1x2x32xf32> to vector<2x32xf32>
    %171 = vector.shape_cast %168 : vector<2x32xf32> to vector<1x2x32xf32>
    tpu.vector_store %arg4[%c0_41, %c0_42, %c0_43], %171 {strides = array<i32>} : memref<2x2x32xf32, #tpu.memory_space<vmem>>, vector<1x2x32xf32>,
    %c1 = arith.constant 1 : index
    %c0_44 = arith.constant 0 : index
    %c0_45 = arith.constant 0 : index
    %172 = vector.load %arg4[%c1, %c0_44, %c0_45] : memref<2x2x32xf32, #tpu.memory_space<vmem>>, vector<1x2x32xf32>
    %173 = vector.shape_cast %172 : vector<1x2x32xf32> to vector<2x32xf32>
    %174 = vector.shape_cast %166 : vector<2x32xf32> to vector<1x2x32xf32>
    tpu.vector_store %arg4[%c1, %c0_44, %c0_45], %174 {strides = array<i32>} : memref<2x2x32xf32, #tpu.memory_space<vmem>>, vector<1x2x32xf32>,
    return
  }
}

</mosaic_0001>

<llo_original>
// kernel: tpu_custom_call.1
$region0: #{tpu_custom_call.1}
  #allocation0 [shape = 'u32[]', space=smem, size = 0x4, offset = 0x4, fixed_abs, tag = 'smem constant byte address 0x4 - core index']
  #allocation1 [shape = 'u32[144,128]{1,0:T(1,128)}', space=vmem, size = 0x12000, scoped, tag = 'internal scratch']
  %s0 = inlined_call_operand.hbm [shape: f32[16,16], index: 0, kind: input, shape index: {}]
  %s1 = inlined_call_operand.hbm [shape: f32[16,128], index: 1, kind: input, shape index: {}]
  %s2 = inlined_call_operand.hbm [shape: f32[32,128], index: 2, kind: input, shape index: {}]
  %s3 = inlined_call_operand.vmem [shape: f32[1,128], index: 3, kind: input, shape index: {}]
  %s4 = inlined_call_operand.hbm [shape: f32[2,2,32], index: 4, kind: output, shape index: {}]
  %s5 = sld [smem:[#allocation0]]
  $region38: #{tpu_custom_call.1} parent=0
    _
  %s7 = ssub.s32 1, %s5
  %s8 = scalar_select 0, %s7, %s5
  $region1: #{tpu_custom_call.1} parent=0
    #allocation2 [shape = 'u8[8192]{0}', space=vmem, size = 0x2000, scoped, tag = 'input window, operand 0, single buffered']
    #allocation3 [shape = 's32[1]{0}', space=sflag, size = 0x4, scoped, tag = 'scoped memory for tpu_custom_call.1']
    #allocation4 [shape = 's32[1]{0}', space=sflag, size = 0x4, scoped, tag = 'scoped memory for tpu_custom_call.1']
    #allocation5 [shape = 'u8[8192]{0}', space=vmem, size = 0x2000, scoped, tag = 'input window, operand 1, single buffered']
    #allocation6 [shape = 's32[1]{0}', space=sflag, size = 0x4, scoped, tag = 'scoped memory for tpu_custom_call.1']
    #allocation7 [shape = 'u8[16384]{0}', space=vmem, size = 0x4000, scoped, tag = 'input window, operand 2, single buffered']
    #allocation8 [shape = 'u8[2048]{0}', space=vmem, size = 0x800, scoped, tag = 'output window, operand 0, single buffered']
    %9 = vsyncpa [#allocation3], 0
    %10 = vsyncpa [#allocation6], 0
    %11 = vsyncpa [#allocation4], 0
    // Predicated region
    $region2: #{tpu_custom_call.1} parent=1 // pred_check
      _
    $region3: #{tpu_custom_call.1} parent=1 // pred_check_branch
      %13 = sbr.rel (0) target = $region5
    $region4: #{tpu_custom_call.1} parent=1 // pred_region
      %s15 = ssub.s32 256, 256
      %16 = vsyncadd [#allocation3], %s15
      %s17 = sshll.u32 [#allocation2], 4
      %s18 = int_to_ptr.vmem [resolvable:$true] %s17
      %23 = dma.hbm_to_vmem [thread:$0]  %s0, 256, %s18, [#allocation3], 128, 128, 8
    $region5: #{tpu_custom_call.1} parent=1 // pred_fallthru
      _
    // Predicated region
    $region6: #{tpu_custom_call.1} parent=1 // pred_check
      _
    $region7: #{tpu_custom_call.1} parent=1 // pred_check_branch
      %25 = sbr.rel (0) target = $region9
    $region8: #{tpu_custom_call.1} parent=1 // pred_region
      %s27 = ssub.s32 256, 256
      %28 = vsyncadd [#allocation6], %s27
      %s29 = sshll.u32 [#allocation5], 4
      %s30 = int_to_ptr.vmem [resolvable:$true] %s29
      %35 = dma.hbm_to_vmem [thread:$0]  %s1, 256, %s30, [#allocation6], 128, 128, 8
    $region9: #{tpu_custom_call.1} parent=1 // pred_fallthru
      _
    // Predicated region
    $region10: #{tpu_custom_call.1} parent=1 // pred_check
      _
    $region11: #{tpu_custom_call.1} parent=1 // pred_check_branch
      %37 = sbr.rel (0) target = $region13
    $region12: #{tpu_custom_call.1} parent=1 // pred_region
      %s39 = ssub.s32 512, 512
      %40 = vsyncadd [#allocation6], %s39
      %s41 = sshll.u32 [#allocation7], 4
      %s42 = int_to_ptr.vmem [resolvable:$true] %s41
      %47 = dma.hbm_to_vmem [thread:$0]  %s2, 512, %s42, [#allocation6], 128, 128, 8
    $region13: #{tpu_custom_call.1} parent=1 // pred_fallthru
      _
    // Predicated region
    $region14: #{tpu_custom_call.1} parent=1 // pred_check
      _
    $region15: #{tpu_custom_call.1} parent=1 // pred_check_branch
      %49 = sbr.rel (0) target = $region17
    $region16: #{tpu_custom_call.1} parent=1 // pred_region
      _
    $region17: #{tpu_custom_call.1} parent=1 // pred_fallthru
      _
    // Predicated region
    $region18: #{tpu_custom_call.1} parent=1 // pred_check
      _
    $region19: #{tpu_custom_call.1} parent=1 // pred_check_branch
      %51 = sbr.rel (0) target = $region21
    $region20: #{tpu_custom_call.1} parent=1 // pred_region
      %52 = dma.done [#allocation3], 256
    $region21: #{tpu_custom_call.1} parent=1 // pred_fallthru
      _
    // Predicated region
    $region22: #{tpu_custom_call.1} parent=1 // pred_check
      _
    $region23: #{tpu_custom_call.1} parent=1 // pred_check_branch
      %54 = sbr.rel (0) target = $region25
    $region24: #{tpu_custom_call.1} parent=1 // pred_region
      %55 = dma.done [#allocation6], 256
    $region25: #{tpu_custom_call.1} parent=1 // pred_fallthru
      _
    // Predicated region
    $region26: #{tpu_custom_call.1} parent=1 // pred_check
      _
    $region27: #{tpu_custom_call.1} parent=1 // pred_check_branch
      %57 = sbr.rel (0) target = $region29
    $region28: #{tpu_custom_call.1} parent=1 // pred_region
      %58 = dma.done [#allocation6], 512
    $region29: #{tpu_custom_call.1} parent=1 // pred_fallthru
      _
    %v59 = vld [vmem:[#allocation7] sm:$0xff]
    %v60 = vld [vmem:[#allocation7 + $0x8] sm:$0xff]
    %v61 = vld [vmem:[#allocation7 + $0x10] sm:$0xff]
    %v62 = vld [vmem:[#allocation7 + $0x18] sm:$0xff]
    %v63 = vld [vmem:[#allocation2] sm:$0xff]
    %v64 = vld [vmem:[#allocation2 + $0x8] sm:$0xff]
    %v65 = vld [vmem:[#allocation5] sm:$0xff]
    %v66 = vld [vmem:[#allocation5 + $0x8] sm:$0xff]
    %v67 = vld [vmem:[%s3] sm:$0x1]
    %v69 = vlaneseq
    %v70 = vshrl.u32 %v69, 7
    %v71 = vsub.s32 0, %v70
    %v72 = vrot.slane %v67, %v71
    %vm74 = vcmask 130048
    %v76 = vsel %vm74, %v63, 0
    %v79 = vsel %vm74, %v64, 0
    %81 = vmatprep.subr.mxu0 0.0
    %82 = vmatpush1.msra.mxu0 %v65
    %83 = vmatprep.subr.mxu0 0.0
    %84 = vmatpush1.msra.mxu0 %v66
    %85 = vmatprep.subr.mxu0 0.0
    %86 = vmatpush1.msra.mxu0 0.0
    %87 = vmatprep.subr.mxu0 0.0
    %88 = vmatpush1.msra.mxu0 0.0
    %89 = vmatprep.subr.mxu0 0.0
    %90 = vmatpush1.msra.mxu0 0.0
    %91 = vmatprep.subr.mxu0 0.0
    %92 = vmatpush1.msra.mxu0 0.0
    %93 = vmatprep.subr.mxu0 0.0
    %94 = vmatpush1.msra.mxu0 0.0
    %95 = vmatprep.subr.mxu0 0.0
    %96 = vmatpush1.msra.mxu0 0.0
    %97 = vmatprep.subr.mxu0 0.0
    %98 = vmatpush1.msra.mxu0 0.0
    %99 = vmatprep.subr.mxu0 0.0
    %100 = vmatpush1.msra.mxu0 0.0
    %101 = vmatprep.subr.mxu0 0.0
    %102 = vmatpush1.msra.mxu0 0.0
    %103 = vmatprep.subr.mxu0 0.0
    %104 = vmatpush1.msra.mxu0 0.0
    %105 = vmatprep.subr.mxu0 0.0
    %106 = vmatpush1.msra.mxu0 0.0
    %107 = vmatprep.subr.mxu0 0.0
    %108 = vmatpush1.msra.mxu0 0.0
    %109 = vmatprep.subr.mxu0 0.0
    %110 = vmatpush1.msra.mxu0 0.0
    %111 = vmatprep.subr.mxu0 0.0
    %112 = vmatpush1.msra.mxu0 0.0
    %113 = vmatprep.subr.mxu0 0.0
    %114 = vmatpush1.msra.mxu0 0.0
    %115 = vmatprep.subr.mxu0 0.0
    %116 = vmatpush1.msra.mxu0 0.0
    %117 = vmatprep.subr.mxu0 0.0
    %118 = vmatpush1.msra.mxu0 0.0
    %119 = vmatprep.subr.mxu0 0.0
    %120 = vmatpush1.msra.mxu0 0.0
    %121 = vmatprep.subr.mxu0 0.0
    %122 = vmatpush1.msra.mxu0 0.0
    %123 = vmatprep.subr.mxu0 0.0
    %124 = vmatpush1.msra.mxu0 0.0
    %125 = vmatprep.subr.mxu0 0.0
    %126 = vmatpush1.msra.mxu0 0.0
    %127 = vmatprep.subr.mxu0 0.0
    %128 = vmatpush1.msra.mxu0 0.0
    %129 = vmatprep.subr.mxu0 0.0
    %130 = vmatpush1.msra.mxu0 0.0
    %131 = vmatprep.subr.mxu0 0.0
    %132 = vmatpush1.msra.mxu0 0.0
    %133 = vmatprep.subr.mxu0 0.0
    %134 = vmatpush1.msra.mxu0 0.0
    %135 = vmatprep.subr.mxu0 0.0
    %136 = vmatpush1.msra.mxu0 0.0
    %137 = vmatprep.subr.mxu0 0.0
    %138 = vmatpush1.msra.mxu0 0.0
    %139 = vmatprep.subr.mxu0 0.0
    %140 = vmatpush1.msra.mxu0 0.0
    %141 = vmatprep.subr.mxu0 0.0
    %142 = vmatpush1.msra.mxu0 0.0
    %143 = vmatprep.subr.mxu0 0.0
    %144 = vmatpush1.msra.mxu0 0.0
    %145 = vmatprep.mubr.f32.mxu0 0.0
    %146 = vmatmul.mubr.f32.gmra.mrb[0].mxu0 %v76
    %v147 = vpop.f32.mrb[0].mxu0
    %v148 = vadd.f32 %v72, %v147
    %v149 = vpop.f32.mrb[0].mxu0
    %150 = vmatprep.mubr.f32.mxu0 0.0
    %151 = vmatmul.mubr.f32.gmra.mrb[0].mxu0 %v79
    %v152 = vpop.f32.mrb[0].mxu0
    %v153 = vadd.f32 %v72, %v152
    %v154 = vpop.f32.mrb[0].mxu0
    %155 = vdwg.mxu0
    %vm156 = vcmask 261120
    %v158 = vsel %vm156, 0.0, 0
    %160 = vmatprep.subr.mxu0 0.0
    %161 = vmatpush1.msra.mxu0 %v59
    %162 = vmatprep.subr.mxu0 0.0
    %163 = vmatpush1.msra.mxu0 %v60
    %164 = vmatprep.subr.mxu0 0.0
    %165 = vmatpush1.msra.mxu0 %v61
    %166 = vmatprep.subr.mxu0 0.0
    %167 = vmatpush1.msra.mxu0 %v62
    %168 = vmatprep.subr.mxu0 0.0
    %169 = vmatpush1.msra.mxu0 0.0
    %170 = vmatprep.subr.mxu0 0.0
    %171 = vmatpush1.msra.mxu0 0.0
    %172 = vmatprep.subr.mxu0 0.0
    %173 = vmatpush1.msra.mxu0 0.0
    %174 = vmatprep.subr.mxu0 0.0
    %175 = vmatpush1.msra.mxu0 0.0
    %176 = vmatprep.subr.mxu0 0.0
    %177 = vmatpush1.msra.mxu0 0.0
    %178 = vmatprep.subr.mxu0 0.0
    %179 = vmatpush1.msra.mxu0 0.0
    %180 = vmatprep.subr.mxu0 0.0
    %181 = vmatpush1.msra.mxu0 0.0
    %182 = vmatprep.subr.mxu0 0.0
    %183 = vmatpush1.msra.mxu0 0.0
    %184 = vmatprep.subr.mxu0 0.0
    %185 = vmatpush1.msra.mxu0 0.0
    %186 = vmatprep.subr.mxu0 0.0
    %187 = vmatpush1.msra.mxu0 0.0
    %188 = vmatprep.subr.mxu0 0.0
    %189 = vmatpush1.msra.mxu0 0.0
    %190 = vmatprep.subr.mxu0 0.0
    %191 = vmatpush1.msra.mxu0 0.0
    %192 = vmatprep.subr.mxu0 0.0
    %193 = vmatpush1.msra.mxu0 0.0
    %194 = vmatprep.subr.mxu0 0.0
    %195 = vmatpush1.msra.mxu0 0.0
    %196 = vmatprep.subr.mxu0 0.0
    %197 = vmatpush1.msra.mxu0 0.0
    %198 = vmatprep.subr.mxu0 0.0
    %199 = vmatpush1.msra.mxu0 0.0
    %200 = vmatprep.subr.mxu0 0.0
    %201 = vmatpush1.msra.mxu0 0.0
    %202 = vmatprep.subr.mxu0 0.0
    %203 = vmatpush1.msra.mxu0 0.0
    %204 = vmatprep.subr.mxu0 0.0
    %205 = vmatpush1.msra.mxu0 0.0
    %206 = vmatprep.subr.mxu0 0.0
    %207 = vmatpush1.msra.mxu0 0.0
    %208 = vmatprep.subr.mxu0 0.0
    %209 = vmatpush1.msra.mxu0 0.0
    %210 = vmatprep.subr.mxu0 0.0
    %211 = vmatpush1.msra.mxu0 0.0
    %212 = vmatprep.subr.mxu0 0.0
    %213 = vmatpush1.msra.mxu0 0.0
    %214 = vmatprep.subr.mxu0 0.0
    %215 = vmatpush1.msra.mxu0 0.0
    %216 = vmatprep.subr.mxu0 0.0
    %217 = vmatpush1.msra.mxu0 0.0
    %218 = vmatprep.subr.mxu0 0.0
    %219 = vmatpush1.msra.mxu0 0.0
    %220 = vmatprep.subr.mxu0 0.0
    %221 = vmatpush1.msra.mxu0 0.0
    %222 = vmatprep.subr.mxu0 0.0
    %223 = vmatpush1.msra.mxu0 0.0
    %224 = vmatprep.mubr.f32.mxu0 0.0
    %225 = vmatmul.mubr.f32.gmra.mrb[0].mxu0 %v158
    %v226 = vpop.f32.mrb[0].mxu0
    %v227 = vadd.f32 0.0, %v226
    %v228 = vpop.f32.mrb[0].mxu0
    %229 = vdwg.mxu0
    %v230 = vadd.f32 %v148, %v227
    %v231 = vmul.f32 %v230, 0.5
    %v232 = vtanh.pop %v231
    %v233 = vmul.f32 %v232, 0.5
    %v234 = vadd.f32 %v233, 0.5
    %v235 = vtanh.pop %v230
    %v236 = vmul.f32 %v234, 0.0
    %238 = vrot.lane.b32.xlu0 %v235, 64
    %v239 = vpop.permute.xlu0 %238
    %v241 = vmul.f32 %v234, %v239
    %243 = vrot.lane.b32.xlu0 %v241, 32
    %v244 = vpop.permute.xlu0 %243
    %v246 = vadd.f32 %v236, %v244
    %v247 = vtanh.pop %v246
    %249 = vrot.lane.b32.xlu0 %v247, 64
    %v250 = vpop.permute.xlu0 %249
    %v252 = vmul.f32 %v234, %v250
    %254 = vrot.lane.b32.xlu0 %v252, 32
    %v255 = vpop.permute.xlu0 %254
    %v256 = vsel %vm156, %v255, 0
    %258 = vmatprep.subr.mxu0 0.0
    %259 = vmatpush1.msra.mxu0 %v59
    %260 = vmatprep.subr.mxu0 0.0
    %261 = vmatpush1.msra.mxu0 %v60
    %262 = vmatprep.subr.mxu0 0.0
    %263 = vmatpush1.msra.mxu0 %v61
    %264 = vmatprep.subr.mxu0 0.0
    %265 = vmatpush1.msra.mxu0 %v62
    %266 = vmatprep.subr.mxu0 0.0
    %267 = vmatpush1.msra.mxu0 0.0
    %268 = vmatprep.subr.mxu0 0.0
    %269 = vmatpush1.msra.mxu0 0.0
    %270 = vmatprep.subr.mxu0 0.0
    %271 = vmatpush1.msra.mxu0 0.0
    %272 = vmatprep.subr.mxu0 0.0
    %273 = vmatpush1.msra.mxu0 0.0
    %274 = vmatprep.subr.mxu0 0.0
    %275 = vmatpush1.msra.mxu0 0.0
    %276 = vmatprep.subr.mxu0 0.0
    %277 = vmatpush1.msra.mxu0 0.0
    %278 = vmatprep.subr.mxu0 0.0
    %279 = vmatpush1.msra.mxu0 0.0
    %280 = vmatprep.subr.mxu0 0.0
    %281 = vmatpush1.msra.mxu0 0.0
    %282 = vmatprep.subr.mxu0 0.0
    %283 = vmatpush1.msra.mxu0 0.0
    %284 = vmatprep.subr.mxu0 0.0
    %285 = vmatpush1.msra.mxu0 0.0
    %286 = vmatprep.subr.mxu0 0.0
    %287 = vmatpush1.msra.mxu0 0.0
    %288 = vmatprep.subr.mxu0 0.0
    %289 = vmatpush1.msra.mxu0 0.0
    %290 = vmatprep.subr.mxu0 0.0
    %291 = vmatpush1.msra.mxu0 0.0
    %292 = vmatprep.subr.mxu0 0.0
    %293 = vmatpush1.msra.mxu0 0.0
    %294 = vmatprep.subr.mxu0 0.0
    %295 = vmatpush1.msra.mxu0 0.0
    %296 = vmatprep.subr.mxu0 0.0
    %297 = vmatpush1.msra.mxu0 0.0
    %298 = vmatprep.subr.mxu0 0.0
    %299 = vmatpush1.msra.mxu0 0.0
    %300 = vmatprep.subr.mxu0 0.0
    %301 = vmatpush1.msra.mxu0 0.0
    %302 = vmatprep.subr.mxu0 0.0
    %303 = vmatpush1.msra.mxu0 0.0
    %304 = vmatprep.subr.mxu0 0.0
    %305 = vmatpush1.msra.mxu0 0.0
    %306 = vmatprep.subr.mxu0 0.0
    %307 = vmatpush1.msra.mxu0 0.0
    %308 = vmatprep.subr.mxu0 0.0
    %309 = vmatpush1.msra.mxu0 0.0
    %310 = vmatprep.subr.mxu0 0.0
    %311 = vmatpush1.msra.mxu0 0.0
    %312 = vmatprep.subr.mxu0 0.0
    %313 = vmatpush1.msra.mxu0 0.0
    %314 = vmatprep.subr.mxu0 0.0
    %315 = vmatpush1.msra.mxu0 0.0
    %316 = vmatprep.subr.mxu0 0.0
    %317 = vmatpush1.msra.mxu0 0.0
    %318 = vmatprep.subr.mxu0 0.0
    %319 = vmatpush1.msra.mxu0 0.0
    %320 = vmatprep.subr.mxu0 0.0
    %321 = vmatpush1.msra.mxu0 0.0
    %322 = vmatprep.mubr.f32.mxu0 0.0
    %323 = vmatmul.mubr.f32.gmra.mrb[0].mxu0 %v256
    %v324 = vpop.f32.mrb[0].mxu0
    %v325 = vadd.f32 0.0, %v324
    %v326 = vpop.f32.mrb[0].mxu0
    %327 = vdwg.mxu0
    %v329 = vrot.slane %v325, 6
    %v331 = vadd.f32 %v148, %v329
    %v332 = vmul.f32 %v331, 0.5
    %v333 = vtanh.pop %v332
    %v334 = vmul.f32 %v333, 0.5
    %v335 = vadd.f32 %v334, 0.5
    %v336 = vtanh.pop %v331
    %v338 = vrot.slane %v246, 6
    %v340 = vmul.f32 %v335, %v338
    %342 = vrot.lane.b32.xlu0 %v336, 64
    %v343 = vpop.permute.xlu0 %342
    %v345 = vmul.f32 %v335, %v343
    %347 = vrot.lane.b32.xlu0 %v345, 32
    %v348 = vpop.permute.xlu0 %347
    %v350 = vadd.f32 %v340, %v348
    %v351 = vtanh.pop %v350
    %353 = vrot.lane.b32.xlu0 %v351, 64
    %v354 = vpop.permute.xlu0 %353
    %v356 = vmul.f32 %v335, %v354
    %v358 = vrot.slane %v356, 2
    %359 = vrot.lane.b32.xlu0 %v358, 32
    %v360 = vpop.permute.xlu0 %359
    %v361 = vsel %vm156, %v360, 0
    %363 = vmatprep.subr.mxu0 0.0
    %364 = vmatpush1.msra.mxu0 %v59
    %365 = vmatprep.subr.mxu0 0.0
    %366 = vmatpush1.msra.mxu0 %v60
    %367 = vmatprep.subr.mxu0 0.0
    %368 = vmatpush1.msra.mxu0 %v61
    %369 = vmatprep.subr.mxu0 0.0
    %370 = vmatpush1.msra.mxu0 %v62
    %371 = vmatprep.subr.mxu0 0.0
    %372 = vmatpush1.msra.mxu0 0.0
    %373 = vmatprep.subr.mxu0 0.0
    %374 = vmatpush1.msra.mxu0 0.0
    %375 = vmatprep.subr.mxu0 0.0
    %376 = vmatpush1.msra.mxu0 0.0
    %377 = vmatprep.subr.mxu0 0.0
    %378 = vmatpush1.msra.mxu0 0.0
    %379 = vmatprep.subr.mxu0 0.0
    %380 = vmatpush1.msra.mxu0 0.0
    %381 = vmatprep.subr.mxu0 0.0
    %382 = vmatpush1.msra.mxu0 0.0
    %383 = vmatprep.subr.mxu0 0.0
    %384 = vmatpush1.msra.mxu0 0.0
    %385 = vmatprep.subr.mxu0 0.0
    %386 = vmatpush1.msra.mxu0 0.0
    %387 = vmatprep.subr.mxu0 0.0
    %388 = vmatpush1.msra.mxu0 0.0
    %389 = vmatprep.subr.mxu0 0.0
    %390 = vmatpush1.msra.mxu0 0.0
    %391 = vmatprep.subr.mxu0 0.0
    %392 = vmatpush1.msra.mxu0 0.0
    %393 = vmatprep.subr.mxu0 0.0
    %394 = vmatpush1.msra.mxu0 0.0
    %395 = vmatprep.subr.mxu0 0.0
    %396 = vmatpush1.msra.mxu0 0.0
    %397 = vmatprep.subr.mxu0 0.0
    %398 = vmatpush1.msra.mxu0 0.0
    %399 = vmatprep.subr.mxu0 0.0
    %400 = vmatpush1.msra.mxu0 0.0
    %401 = vmatprep.subr.mxu0 0.0
    %402 = vmatpush1.msra.mxu0 0.0
    %403 = vmatprep.subr.mxu0 0.0
    %404 = vmatpush1.msra.mxu0 0.0
    %405 = vmatprep.subr.mxu0 0.0
    %406 = vmatpush1.msra.mxu0 0.0
    %407 = vmatprep.subr.mxu0 0.0
    %408 = vmatpush1.msra.mxu0 0.0
    %409 = vmatprep.subr.mxu0 0.0
    %410 = vmatpush1.msra.mxu0 0.0
    %411 = vmatprep.subr.mxu0 0.0
    %412 = vmatpush1.msra.mxu0 0.0
    %413 = vmatprep.subr.mxu0 0.0
    %414 = vmatpush1.msra.mxu0 0.0
    %415 = vmatprep.subr.mxu0 0.0
    %416 = vmatpush1.msra.mxu0 0.0
    %417 = vmatprep.subr.mxu0 0.0
    %418 = vmatpush1.msra.mxu0 0.0
    %419 = vmatprep.subr.mxu0 0.0
    %420 = vmatpush1.msra.mxu0 0.0
    %421 = vmatprep.subr.mxu0 0.0
    %422 = vmatpush1.msra.mxu0 0.0
    %423 = vmatprep.subr.mxu0 0.0
    %424 = vmatpush1.msra.mxu0 0.0
    %425 = vmatprep.subr.mxu0 0.0
    %426 = vmatpush1.msra.mxu0 0.0
    %427 = vmatprep.mubr.f32.mxu0 0.0
    %428 = vmatmul.mubr.f32.gmra.mrb[0].mxu0 %v361
    %v429 = vpop.f32.mrb[0].mxu0
    %v430 = vadd.f32 0.0, %v429
    %v431 = vpop.f32.mrb[0].mxu0
    %432 = vdwg.mxu0
    %v434 = vrot.slane %v430, 4
    %v436 = vadd.f32 %v148, %v434
    %v437 = vmul.f32 %v436, 0.5
    %v438 = vtanh.pop %v437
    %v439 = vmul.f32 %v438, 0.5
    %v440 = vadd.f32 %v439, 0.5
    %v441 = vtanh.pop %v436
    %v443 = vrot.slane %v350, 6
    %v445 = vmul.f32 %v440, %v443
    %447 = vrot.lane.b32.xlu0 %v441, 64
    %v448 = vpop.permute.xlu0 %447
    %v450 = vmul.f32 %v440, %v448
    %452 = vrot.lane.b32.xlu0 %v450, 32
    %v453 = vpop.permute.xlu0 %452
    %v455 = vadd.f32 %v445, %v453
    %v456 = vtanh.pop %v455
    %458 = vrot.lane.b32.xlu0 %v456, 64
    %v459 = vpop.permute.xlu0 %458
    %v461 = vmul.f32 %v440, %v459
    %v463 = vrot.slane %v461, 4
    %464 = vrot.lane.b32.xlu0 %v463, 32
    %v465 = vpop.permute.xlu0 %464
    %v466 = vsel %vm156, %v465, 0
    %468 = vmatprep.subr.mxu0 0.0
    %469 = vmatpush1.msra.mxu0 %v59
    %470 = vmatprep.subr.mxu0 0.0
    %471 = vmatpush1.msra.mxu0 %v60
    %472 = vmatprep.subr.mxu0 0.0
    %473 = vmatpush1.msra.mxu0 %v61
    %474 = vmatprep.subr.mxu0 0.0
    %475 = vmatpush1.msra.mxu0 %v62
    %476 = vmatprep.subr.mxu0 0.0
    %477 = vmatpush1.msra.mxu0 0.0
    %478 = vmatprep.subr.mxu0 0.0
    %479 = vmatpush1.msra.mxu0 0.0
    %480 = vmatprep.subr.mxu0 0.0
    %481 = vmatpush1.msra.mxu0 0.0
    %482 = vmatprep.subr.mxu0 0.0
    %483 = vmatpush1.msra.mxu0 0.0
    %484 = vmatprep.subr.mxu0 0.0
    %485 = vmatpush1.msra.mxu0 0.0
    %486 = vmatprep.subr.mxu0 0.0
    %487 = vmatpush1.msra.mxu0 0.0
    %488 = vmatprep.subr.mxu0 0.0
    %489 = vmatpush1.msra.mxu0 0.0
    %490 = vmatprep.subr.mxu0 0.0
    %491 = vmatpush1.msra.mxu0 0.0
    %492 = vmatprep.subr.mxu0 0.0
    %493 = vmatpush1.msra.mxu0 0.0
    %494 = vmatprep.subr.mxu0 0.0
    %495 = vmatpush1.msra.mxu0 0.0
    %496 = vmatprep.subr.mxu0 0.0
    %497 = vmatpush1.msra.mxu0 0.0
    %498 = vmatprep.subr.mxu0 0.0
    %499 = vmatpush1.msra.mxu0 0.0
    %500 = vmatprep.subr.mxu0 0.0
    %501 = vmatpush1.msra.mxu0 0.0
    %502 = vmatprep.subr.mxu0 0.0
    %503 = vmatpush1.msra.mxu0 0.0
    %504 = vmatprep.subr.mxu0 0.0
    %505 = vmatpush1.msra.mxu0 0.0
    %506 = vmatprep.subr.mxu0 0.0
    %507 = vmatpush1.msra.mxu0 0.0
    %508 = vmatprep.subr.mxu0 0.0
    %509 = vmatpush1.msra.mxu0 0.0
    %510 = vmatprep.subr.mxu0 0.0
    %511 = vmatpush1.msra.mxu0 0.0
    %512 = vmatprep.subr.mxu0 0.0
    %513 = vmatpush1.msra.mxu0 0.0
    %514 = vmatprep.subr.mxu0 0.0
    %515 = vmatpush1.msra.mxu0 0.0
    %516 = vmatprep.subr.mxu0 0.0
    %517 = vmatpush1.msra.mxu0 0.0
    %518 = vmatprep.subr.mxu0 0.0
    %519 = vmatpush1.msra.mxu0 0.0
    %520 = vmatprep.subr.mxu0 0.0
    %521 = vmatpush1.msra.mxu0 0.0
    %522 = vmatprep.subr.mxu0 0.0
    %523 = vmatpush1.msra.mxu0 0.0
    %524 = vmatprep.subr.mxu0 0.0
    %525 = vmatpush1.msra.mxu0 0.0
    %526 = vmatprep.subr.mxu0 0.0
    %527 = vmatpush1.msra.mxu0 0.0
    %528 = vmatprep.subr.mxu0 0.0
    %529 = vmatpush1.msra.mxu0 0.0
    %530 = vmatprep.subr.mxu0 0.0
    %531 = vmatpush1.msra.mxu0 0.0
    %532 = vmatprep.mubr.f32.mxu0 0.0
    %533 = vmatmul.mubr.f32.gmra.mrb[0].mxu0 %v466
    %v534 = vpop.f32.mrb[0].mxu0
    %v535 = vadd.f32 0.0, %v534
    %v536 = vpop.f32.mrb[0].mxu0
    %537 = vdwg.mxu0
    %v539 = vrot.slane %v535, 2
    %v541 = vadd.f32 %v148, %v539
    %v542 = vmul.f32 %v541, 0.5
    %v543 = vtanh.pop %v542
    %v544 = vmul.f32 %v543, 0.5
    %v545 = vadd.f32 %v544, 0.5
    %v546 = vtanh.pop %v541
    %v548 = vrot.slane %v455, 6
    %v550 = vmul.f32 %v545, %v548
    %552 = vrot.lane.b32.xlu0 %v546, 64
    %v553 = vpop.permute.xlu0 %552
    %v555 = vmul.f32 %v545, %v553
    %557 = vrot.lane.b32.xlu0 %v555, 32
    %v558 = vpop.permute.xlu0 %557
    %v560 = vadd.f32 %v550, %v558
    %v561 = vtanh.pop %v560
    %563 = vrot.lane.b32.xlu0 %v561, 64
    %v564 = vpop.permute.xlu0 %563
    %v566 = vmul.f32 %v545, %v564
    %v568 = vrot.slane %v566, 6
    %569 = vrot.lane.b32.xlu0 %v568, 32
    %v570 = vpop.permute.xlu0 %569
    %v571 = vsel %vm156, %v570, 0
    %573 = vmatprep.subr.mxu0 0.0
    %574 = vmatpush1.msra.mxu0 %v59
    %575 = vmatprep.subr.mxu0 0.0
    %576 = vmatpush1.msra.mxu0 %v60
    %577 = vmatprep.subr.mxu0 0.0
    %578 = vmatpush1.msra.mxu0 %v61
    %579 = vmatprep.subr.mxu0 0.0
    %580 = vmatpush1.msra.mxu0 %v62
    %581 = vmatprep.subr.mxu0 0.0
    %582 = vmatpush1.msra.mxu0 0.0
    %583 = vmatprep.subr.mxu0 0.0
    %584 = vmatpush1.msra.mxu0 0.0
    %585 = vmatprep.subr.mxu0 0.0
    %586 = vmatpush1.msra.mxu0 0.0
    %587 = vmatprep.subr.mxu0 0.0
    %588 = vmatpush1.msra.mxu0 0.0
    %589 = vmatprep.subr.mxu0 0.0
    %590 = vmatpush1.msra.mxu0 0.0
    %591 = vmatprep.subr.mxu0 0.0
    %592 = vmatpush1.msra.mxu0 0.0
    %593 = vmatprep.subr.mxu0 0.0
    %594 = vmatpush1.msra.mxu0 0.0
    %595 = vmatprep.subr.mxu0 0.0
    %596 = vmatpush1.msra.mxu0 0.0
    %597 = vmatprep.subr.mxu0 0.0
    %598 = vmatpush1.msra.mxu0 0.0
    %599 = vmatprep.subr.mxu0 0.0
    %600 = vmatpush1.msra.mxu0 0.0
    %601 = vmatprep.subr.mxu0 0.0
    %602 = vmatpush1.msra.mxu0 0.0
    %603 = vmatprep.subr.mxu0 0.0
    %604 = vmatpush1.msra.mxu0 0.0
    %605 = vmatprep.subr.mxu0 0.0
    %606 = vmatpush1.msra.mxu0 0.0
    %607 = vmatprep.subr.mxu0 0.0
    %608 = vmatpush1.msra.mxu0 0.0
    %609 = vmatprep.subr.mxu0 0.0
    %610 = vmatpush1.msra.mxu0 0.0
    %611 = vmatprep.subr.mxu0 0.0
    %612 = vmatpush1.msra.mxu0 0.0
    %613 = vmatprep.subr.mxu0 0.0
    %614 = vmatpush1.msra.mxu0 0.0
    %615 = vmatprep.subr.mxu0 0.0
    %616 = vmatpush1.msra.mxu0 0.0
    %617 = vmatprep.subr.mxu0 0.0
    %618 = vmatpush1.msra.mxu0 0.0
    %619 = vmatprep.subr.mxu0 0.0
    %620 = vmatpush1.msra.mxu0 0.0
    %621 = vmatprep.subr.mxu0 0.0
    %622 = vmatpush1.msra.mxu0 0.0
    %623 = vmatprep.subr.mxu0 0.0
    %624 = vmatpush1.msra.mxu0 0.0
    %625 = vmatprep.subr.mxu0 0.0
    %626 = vmatpush1.msra.mxu0 0.0
    %627 = vmatprep.subr.mxu0 0.0
    %628 = vmatpush1.msra.mxu0 0.0
    %629 = vmatprep.subr.mxu0 0.0
    %630 = vmatpush1.msra.mxu0 0.0
    %631 = vmatprep.subr.mxu0 0.0
    %632 = vmatpush1.msra.mxu0 0.0
    %633 = vmatprep.subr.mxu0 0.0
    %634 = vmatpush1.msra.mxu0 0.0
    %635 = vmatprep.subr.mxu0 0.0
    %636 = vmatpush1.msra.mxu0 0.0
    %637 = vmatprep.mubr.f32.mxu0 0.0
    %638 = vmatmul.mubr.f32.gmra.mrb[0].mxu0 %v571
    %v639 = vpop.f32.mrb[0].mxu0
    %v640 = vadd.f32 0.0, %v639
    %v641 = vpop.f32.mrb[0].mxu0
    %642 = vdwg.mxu0
    %v643 = vadd.f32 %v153, %v640
    %v644 = vmul.f32 %v643, 0.5
    %v645 = vtanh.pop %v644
    %v646 = vmul.f32 %v645, 0.5
    %v647 = vadd.f32 %v646, 0.5
    %v648 = vtanh.pop %v643
    %v650 = vrot.slane %v560, 6
    %v652 = vmul.f32 %v647, %v650
    %654 = vrot.lane.b32.xlu0 %v648, 64
    %v655 = vpop.permute.xlu0 %654
    %v657 = vmul.f32 %v647, %v655
    %659 = vrot.lane.b32.xlu0 %v657, 32
    %v660 = vpop.permute.xlu0 %659
    %v662 = vadd.f32 %v652, %v660
    %v663 = vtanh.pop %v662
    %665 = vrot.lane.b32.xlu0 %v663, 64
    %v666 = vpop.permute.xlu0 %665
    %v668 = vmul.f32 %v647, %v666
    %670 = vrot.lane.b32.xlu0 %v668, 32
    %v671 = vpop.permute.xlu0 %670
    %v672 = vsel %vm156, %v671, 0
    %674 = vmatprep.subr.mxu0 0.0
    %675 = vmatpush1.msra.mxu0 %v59
    %676 = vmatprep.subr.mxu0 0.0
    %677 = vmatpush1.msra.mxu0 %v60
    %678 = vmatprep.subr.mxu0 0.0
    %679 = vmatpush1.msra.mxu0 %v61
    %680 = vmatprep.subr.mxu0 0.0
    %681 = vmatpush1.msra.mxu0 %v62
    %682 = vmatprep.subr.mxu0 0.0
    %683 = vmatpush1.msra.mxu0 0.0
    %684 = vmatprep.subr.mxu0 0.0
    %685 = vmatpush1.msra.mxu0 0.0
    %686 = vmatprep.subr.mxu0 0.0
    %687 = vmatpush1.msra.mxu0 0.0
    %688 = vmatprep.subr.mxu0 0.0
    %689 = vmatpush1.msra.mxu0 0.0
    %690 = vmatprep.subr.mxu0 0.0
    %691 = vmatpush1.msra.mxu0 0.0
    %692 = vmatprep.subr.mxu0 0.0
    %693 = vmatpush1.msra.mxu0 0.0
    %694 = vmatprep.subr.mxu0 0.0
    %695 = vmatpush1.msra.mxu0 0.0
    %696 = vmatprep.subr.mxu0 0.0
    %697 = vmatpush1.msra.mxu0 0.0
    %698 = vmatprep.subr.mxu0 0.0
    %699 = vmatpush1.msra.mxu0 0.0
    %700 = vmatprep.subr.mxu0 0.0
    %701 = vmatpush1.msra.mxu0 0.0
    %702 = vmatprep.subr.mxu0 0.0
    %703 = vmatpush1.msra.mxu0 0.0
    %704 = vmatprep.subr.mxu0 0.0
    %705 = vmatpush1.msra.mxu0 0.0
    %706 = vmatprep.subr.mxu0 0.0
    %707 = vmatpush1.msra.mxu0 0.0
    %708 = vmatprep.subr.mxu0 0.0
    %709 = vmatpush1.msra.mxu0 0.0
    %710 = vmatprep.subr.mxu0 0.0
    %711 = vmatpush1.msra.mxu0 0.0
    %712 = vmatprep.subr.mxu0 0.0
    %713 = vmatpush1.msra.mxu0 0.0
    %714 = vmatprep.subr.mxu0 0.0
    %715 = vmatpush1.msra.mxu0 0.0
    %716 = vmatprep.subr.mxu0 0.0
    %717 = vmatpush1.msra.mxu0 0.0
    %718 = vmatprep.subr.mxu0 0.0
    %719 = vmatpush1.msra.mxu0 0.0
    %720 = vmatprep.subr.mxu0 0.0
    %721 = vmatpush1.msra.mxu0 0.0
    %722 = vmatprep.subr.mxu0 0.0
    %723 = vmatpush1.msra.mxu0 0.0
    %724 = vmatprep.subr.mxu0 0.0
    %725 = vmatpush1.msra.mxu0 0.0
    %726 = vmatprep.subr.mxu0 0.0
    %727 = vmatpush1.msra.mxu0 0.0
    %728 = vmatprep.subr.mxu0 0.0
    %729 = vmatpush1.msra.mxu0 0.0
    %730 = vmatprep.subr.mxu0 0.0
    %731 = vmatpush1.msra.mxu0 0.0
    %732 = vmatprep.subr.mxu0 0.0
    %733 = vmatpush1.msra.mxu0 0.0
    %734 = vmatprep.subr.mxu0 0.0
    %735 = vmatpush1.msra.mxu0 0.0
    %736 = vmatprep.subr.mxu0 0.0
    %737 = vmatpush1.msra.mxu0 0.0
    %738 = vmatprep.mubr.f32.mxu0 0.0
    %739 = vmatmul.mubr.f32.gmra.mrb[0].mxu0 %v672
    %v740 = vpop.f32.mrb[0].mxu0
    %v741 = vadd.f32 0.0, %v740
    %v742 = vpop.f32.mrb[0].mxu0
    %743 = vdwg.mxu0
    %v745 = vrot.slane %v741, 6
    %v747 = vadd.f32 %v153, %v745
    %v748 = vmul.f32 %v747, 0.5
    %v749 = vtanh.pop %v748
    %v750 = vmul.f32 %v749, 0.5
    %v751 = vadd.f32 %v750, 0.5
    %v752 = vtanh.pop %v747
    %v754 = vrot.slane %v662, 6
    %v756 = vmul.f32 %v751, %v754
    %758 = vrot.lane.b32.xlu0 %v752, 64
    %v759 = vpop.permute.xlu0 %758
    %v761 = vmul.f32 %v751, %v759
    %763 = vrot.lane.b32.xlu0 %v761, 32
    %v764 = vpop.permute.xlu0 %763
    %v766 = vadd.f32 %v756, %v764
    %v767 = vtanh.pop %v766
    %769 = vrot.lane.b32.xlu0 %v767, 64
    %v770 = vpop.permute.xlu0 %769
    %v772 = vmul.f32 %v751, %v770
    %v774 = vrot.slane %v772, 2
    %775 = vrot.lane.b32.xlu0 %v774, 32
    %v776 = vpop.permute.xlu0 %775
    %v777 = vsel %vm156, %v776, 0
    %779 = vmatprep.subr.mxu0 0.0
    %780 = vmatpush1.msra.mxu0 %v59
    %781 = vmatprep.subr.mxu0 0.0
    %782 = vmatpush1.msra.mxu0 %v60
    %783 = vmatprep.subr.mxu0 0.0
    %784 = vmatpush1.msra.mxu0 %v61
    %785 = vmatprep.subr.mxu0 0.0
    %786 = vmatpush1.msra.mxu0 %v62
    %787 = vmatprep.subr.mxu0 0.0
    %788 = vmatpush1.msra.mxu0 0.0
    %789 = vmatprep.subr.mxu0 0.0
    %790 = vmatpush1.msra.mxu0 0.0
    %791 = vmatprep.subr.mxu0 0.0
    %792 = vmatpush1.msra.mxu0 0.0
    %793 = vmatprep.subr.mxu0 0.0
    %794 = vmatpush1.msra.mxu0 0.0
    %795 = vmatprep.subr.mxu0 0.0
    %796 = vmatpush1.msra.mxu0 0.0
    %797 = vmatprep.subr.mxu0 0.0
    %798 = vmatpush1.msra.mxu0 0.0
    %799 = vmatprep.subr.mxu0 0.0
    %800 = vmatpush1.msra.mxu0 0.0
    %801 = vmatprep.subr.mxu0 0.0
    %802 = vmatpush1.msra.mxu0 0.0
    %803 = vmatprep.subr.mxu0 0.0
    %804 = vmatpush1.msra.mxu0 0.0
    %805 = vmatprep.subr.mxu0 0.0
    %806 = vmatpush1.msra.mxu0 0.0
    %807 = vmatprep.subr.mxu0 0.0
    %808 = vmatpush1.msra.mxu0 0.0
    %809 = vmatprep.subr.mxu0 0.0
    %810 = vmatpush1.msra.mxu0 0.0
    %811 = vmatprep.subr.mxu0 0.0
    %812 = vmatpush1.msra.mxu0 0.0
    %813 = vmatprep.subr.mxu0 0.0
    %814 = vmatpush1.msra.mxu0 0.0
    %815 = vmatprep.subr.mxu0 0.0
    %816 = vmatpush1.msra.mxu0 0.0
    %817 = vmatprep.subr.mxu0 0.0
    %818 = vmatpush1.msra.mxu0 0.0
    %819 = vmatprep.subr.mxu0 0.0
    %820 = vmatpush1.msra.mxu0 0.0
    %821 = vmatprep.subr.mxu0 0.0
    %822 = vmatpush1.msra.mxu0 0.0
    %823 = vmatprep.subr.mxu0 0.0
    %824 = vmatpush1.msra.mxu0 0.0
    %825 = vmatprep.subr.mxu0 0.0
    %826 = vmatpush1.msra.mxu0 0.0
    %827 = vmatprep.subr.mxu0 0.0
    %828 = vmatpush1.msra.mxu0 0.0
    %829 = vmatprep.subr.mxu0 0.0
    %830 = vmatpush1.msra.mxu0 0.0
    %831 = vmatprep.subr.mxu0 0.0
    %832 = vmatpush1.msra.mxu0 0.0
    %833 = vmatprep.subr.mxu0 0.0
    %834 = vmatpush1.msra.mxu0 0.0
    %835 = vmatprep.subr.mxu0 0.0
    %836 = vmatpush1.msra.mxu0 0.0
    %837 = vmatprep.subr.mxu0 0.0
    %838 = vmatpush1.msra.mxu0 0.0
    %839 = vmatprep.subr.mxu0 0.0
    %840 = vmatpush1.msra.mxu0 0.0
    %841 = vmatprep.subr.mxu0 0.0
    %842 = vmatpush1.msra.mxu0 0.0
    %843 = vmatprep.mubr.f32.mxu0 0.0
    %844 = vmatmul.mubr.f32.gmra.mrb[0].mxu0 %v777
    %v845 = vpop.f32.mrb[0].mxu0
    %v846 = vadd.f32 0.0, %v845
    %v847 = vpop.f32.mrb[0].mxu0
    %848 = vdwg.mxu0
    %v850 = vrot.slane %v846, 4
    %v852 = vadd.f32 %v153, %v850
    %v853 = vmul.f32 %v852, 0.5
    %v854 = vtanh.pop %v853
    %v855 = vmul.f32 %v854, 0.5
    %v856 = vadd.f32 %v855, 0.5
    %v857 = vtanh.pop %v852
    %v859 = vrot.slane %v766, 6
    %v861 = vmul.f32 %v856, %v859
    %863 = vrot.lane.b32.xlu0 %v857, 64
    %v864 = vpop.permute.xlu0 %863
    %v866 = vmul.f32 %v856, %v864
    %868 = vrot.lane.b32.xlu0 %v866, 32
    %v869 = vpop.permute.xlu0 %868
    %v871 = vadd.f32 %v861, %v869
    %v872 = vtanh.pop %v871
    %874 = vrot.lane.b32.xlu0 %v872, 64
    %v875 = vpop.permute.xlu0 %874
    %v877 = vmul.f32 %v856, %v875
    %v879 = vrot.slane %v877, 4
    %880 = vrot.lane.b32.xlu0 %v879, 32
    %v881 = vpop.permute.xlu0 %880
    %v882 = vsel %vm156, %v881, 0
    %884 = vmatprep.subr.mxu0 0.0
    %885 = vmatpush1.msra.mxu0 %v59
    %886 = vmatprep.subr.mxu0 0.0
    %887 = vmatpush1.msra.mxu0 %v60
    %888 = vmatprep.subr.mxu0 0.0
    %889 = vmatpush1.msra.mxu0 %v61
    %890 = vmatprep.subr.mxu0 0.0
    %891 = vmatpush1.msra.mxu0 %v62
    %892 = vmatprep.subr.mxu0 0.0
    %893 = vmatpush1.msra.mxu0 0.0
    %894 = vmatprep.subr.mxu0 0.0
    %895 = vmatpush1.msra.mxu0 0.0
    %896 = vmatprep.subr.mxu0 0.0
    %897 = vmatpush1.msra.mxu0 0.0
    %898 = vmatprep.subr.mxu0 0.0
    %899 = vmatpush1.msra.mxu0 0.0
    %900 = vmatprep.subr.mxu0 0.0
    %901 = vmatpush1.msra.mxu0 0.0
    %902 = vmatprep.subr.mxu0 0.0
    %903 = vmatpush1.msra.mxu0 0.0
    %904 = vmatprep.subr.mxu0 0.0
    %905 = vmatpush1.msra.mxu0 0.0
    %906 = vmatprep.subr.mxu0 0.0
    %907 = vmatpush1.msra.mxu0 0.0
    %908 = vmatprep.subr.mxu0 0.0
    %909 = vmatpush1.msra.mxu0 0.0
    %910 = vmatprep.subr.mxu0 0.0
    %911 = vmatpush1.msra.mxu0 0.0
    %912 = vmatprep.subr.mxu0 0.0
    %913 = vmatpush1.msra.mxu0 0.0
    %914 = vmatprep.subr.mxu0 0.0
    %915 = vmatpush1.msra.mxu0 0.0
    %916 = vmatprep.subr.mxu0 0.0
    %917 = vmatpush1.msra.mxu0 0.0
    %918 = vmatprep.subr.mxu0 0.0
    %919 = vmatpush1.msra.mxu0 0.0
    %920 = vmatprep.subr.mxu0 0.0
    %921 = vmatpush1.msra.mxu0 0.0
    %922 = vmatprep.subr.mxu0 0.0
    %923 = vmatpush1.msra.mxu0 0.0
    %924 = vmatprep.subr.mxu0 0.0
    %925 = vmatpush1.msra.mxu0 0.0
    %926 = vmatprep.subr.mxu0 0.0
    %927 = vmatpush1.msra.mxu0 0.0
    %928 = vmatprep.subr.mxu0 0.0
    %929 = vmatpush1.msra.mxu0 0.0
    %930 = vmatprep.subr.mxu0 0.0
    %931 = vmatpush1.msra.mxu0 0.0
    %932 = vmatprep.subr.mxu0 0.0
    %933 = vmatpush1.msra.mxu0 0.0
    %934 = vmatprep.subr.mxu0 0.0
    %935 = vmatpush1.msra.mxu0 0.0
    %936 = vmatprep.subr.mxu0 0.0
    %937 = vmatpush1.msra.mxu0 0.0
    %938 = vmatprep.subr.mxu0 0.0
    %939 = vmatpush1.msra.mxu0 0.0
    %940 = vmatprep.subr.mxu0 0.0
    %941 = vmatpush1.msra.mxu0 0.0
    %942 = vmatprep.subr.mxu0 0.0
    %943 = vmatpush1.msra.mxu0 0.0
    %944 = vmatprep.subr.mxu0 0.0
    %945 = vmatpush1.msra.mxu0 0.0
    %946 = vmatprep.subr.mxu0 0.0
    %947 = vmatpush1.msra.mxu0 0.0
    %948 = vmatprep.mubr.f32.mxu0 0.0
    %949 = vmatmul.mubr.f32.gmra.mrb[0].mxu0 %v882
    %v950 = vpop.f32.mrb[0].mxu0
    %v951 = vadd.f32 0.0, %v950
    %v952 = vpop.f32.mrb[0].mxu0
    %953 = vdwg.mxu0
    %v955 = vrot.slane %v951, 2
    %v957 = vadd.f32 %v153, %v955
    %v958 = vmul.f32 %v957, 0.5
    %v959 = vtanh.pop %v958
    %v960 = vmul.f32 %v959, 0.5
    %v961 = vadd.f32 %v960, 0.5
    %v962 = vtanh.pop %v957
    %v964 = vrot.slane %v871, 6
    %v966 = vmul.f32 %v961, %v964
    %968 = vrot.lane.b32.xlu0 %v962, 64
    %v969 = vpop.permute.xlu0 %968
    %v971 = vmul.f32 %v961, %v969
    %973 = vrot.lane.b32.xlu0 %v971, 32
    %v974 = vpop.permute.xlu0 %973
    %v976 = vadd.f32 %v966, %v974
    %v977 = vtanh.pop %v976
    %979 = vrot.lane.b32.xlu0 %v977, 64
    %v980 = vpop.permute.xlu0 %979
    %v982 = vmul.f32 %v961, %v980
    %984 = vrot.lane.b32.xlu0 %v982, 32
    %v985 = vpop.permute.xlu0 %984
    %vm987 = vcmask 261126
    %988 = vst.msk [vmem:[#allocation8 - $0x6] sm:$0xc0] %vm987, %v985
    %990 = vrot.lane.b32.xlu0 %v976, 96
    %v991 = vpop.permute.xlu0 %990
    %s993 = scalar_lea.vmem [#allocation8], 2
    %994 = vst.msk [vmem:[%s993 - $0x6] sm:$0xc0] %vm987, %v991
    // Predicated region
    $region30: #{tpu_custom_call.1} parent=1 // pred_check
      _
    $region31: #{tpu_custom_call.1} parent=1 // pred_check_branch
      %996 = sbr.rel (0) target = $region33
    $region32: #{tpu_custom_call.1} parent=1 // pred_region
      %s998 = ssub.s32 64, 64
      %999 = vsyncadd [#allocation4], %s998
      %s1000 = sshll.u32 [#allocation8], 4
      %s1001 = int_to_ptr.vmem [resolvable:$true] %s1000
      %1006 = dma.vmem_to_hbm [thread:$0]  %s1001, 64, %s4, [#allocation4], 32, 32, 2
    $region33: #{tpu_custom_call.1} parent=1 // pred_fallthru
      _
    // Predicated region
    $region34: #{tpu_custom_call.1} parent=1 // pred_check
      _
    $region35: #{tpu_custom_call.1} parent=1 // pred_check_branch
      %1008 = sbr.rel (0) target = $region37
    $region36: #{tpu_custom_call.1} parent=1 // pred_region
      %1009 = dma.done [#allocation4], 64
    $region37: #{tpu_custom_call.1} parent=1 // pred_fallthru
      _
    %1010 = vsyncpa [#allocation3], 1
    %1011 = vsyncpa [#allocation6], 1
    %1012 = vsyncpa [#allocation4], 1

</llo_original>
